<compile_context>
chip_gen: v6e
topology: v6e:2x2x1
jax: 0.10.0
libtpu: 0.0.40
codegen_flags: <defaults>
</compile_context>

<pallas_src>
import jax
import jax.numpy as jnp
from jax.experimental import pallas as pl
from jax.experimental.pallas import tpu as pltpu

BN_EPS = 1e-5
_LANE = 128


# ----------------------------------------------------------------------------
# Kernels
# ----------------------------------------------------------------------------
def vfe_stats_kernel(x_ref, w_ref, psum_ref):
    """Phase 1: per-tile partial sums for the BatchNorm batch statistics.

    x_ref    : (rows_tile, cin)
    w_ref    : (cin, units)
    psum_ref : (1, 2, units) f32   row 0 = sum(y), row 1 = sum(y*y)
    """
    y = jnp.dot(x_ref[...], w_ref[...], preferred_element_type=jnp.float32)
    psum_ref[0, 0:1, :] = jnp.sum(y, axis=0, keepdims=True)
    psum_ref[0, 1:2, :] = jnp.sum(y * y, axis=0, keepdims=True)


def vfe_out_kernel(x_ref, w_ref, ss_ref, mask_ref, out_ref):
    """Phase 2: matmul + folded BN + ReLU + per-voxel max + mask.

    x_ref    : (V*T, cin)
    w_ref    : (cin, units)
    ss_ref   : (2, units) f32     row 0 = scale, row 1 = shift (folded BN)
    mask_ref : (V, T)     f32
    out_ref  : (V, T, 2*units)
    """
    V, T, cout = out_ref.shape
    units = cout // 2

    # Linear (bias folded away by training-mode BN) on the MXU.
    y = jnp.dot(x_ref[...], w_ref[...], preferred_element_type=jnp.float32)
    # Fused BatchNorm affine + ReLU (f32 VPU work).
    y = jnp.maximum(y * ss_ref[0:1, :] + ss_ref[1:2, :], 0.0)    # (V*T, units)

    # Tile boundaries are whole voxels -> reshape stays sublane-aligned.
    y3 = y.reshape(V, T, units)                                  # (V, T, units)
    laf = jnp.max(y3, axis=1, keepdims=True)                     # (V, 1, units)
    laf = jnp.broadcast_to(laf, (V, T, units))

    # Single full-width (lane-dense) store of the whole tile.
    full = jnp.concatenate([y3, laf], axis=2)                    # (V, T, 2*units)
    m = mask_ref[...][:, :, None]                                # (V, T, 1)
    out_ref[...] = (full * m).astype(out_ref.dtype)


# ----------------------------------------------------------------------------
# Tiling helpers
# ----------------------------------------------------------------------------
def _vmem_limit_bytes():
    """48 MiB on 64-MiB-VMEM parts (v7x), 64 MiB on 128-MiB parts (v5e/v6e)."""
    try:
        cap = pltpu.get_tpu_info().vmem_capacity_bytes
    except Exception:
        cap = 64 * 1024 * 1024
    if cap < 100 * 1024 * 1024:
        return 48 * 1024 * 1024
    return 64 * 1024 * 1024


def _choose_output_tiling(K, T, cout, x_itemsize, out_itemsize, vmem_limit):
    """Pick V (voxels per phase-2 tile, multiple of 8) and num_tiles (>= 2)."""
    # Per point-row VMEM bytes, double-buffered.  cin and T lane-pad to 128.
    x_row = _LANE * x_itemsize
    out_row = max(cout, _LANE) * out_itemsize
    mask_row = (_LANE * 4.0) / T
    per_row = 2.0 * (x_row + out_row + mask_row)
    budget_rows = int(0.6 * vmem_limit / per_row)
    target_rows = max(8 * T, min(budget_rows, 16384))

    V = max(8, (target_rows // T) // 8 * 8)
    num_tiles = max(2, pl.cdiv(K, V))
    # Rebalance so the tiles are roughly even (never grows num_tiles).
    V = max(8, ((pl.cdiv(K, num_tiles) + 7) // 8) * 8)
    num_tiles = max(2, pl.cdiv(K, V))
    return V, num_tiles


def _choose_stats_grouping(num_tiles, V, T, x_itemsize, vmem_limit):
    """Group g phase-2 tiles per phase-1 tile (g divides num_tiles)."""
    per_row = 2.0 * _LANE * x_itemsize              # double-buffered x block
    budget_rows = int(0.6 * vmem_limit / per_row)
    max_rows = max(V * T, min(budget_rows, 65536))
    for cand in range(num_tiles, 0, -1):
        if num_tiles % cand == 0 and cand * V * T <= max_rows:
            return cand
    return 1


# ----------------------------------------------------------------------------
# Wrapper
# ----------------------------------------------------------------------------
def vfe_forward(x, mask, w, gamma, beta, *, out_dtype=jnp.float32,
                voxels_per_tile=None):
    """x: (K, T, cin), mask: (K, T), w: (cin, units). Returns (K, T, 2*units)."""
    K, T, cin = x.shape
    units = w.shape[1]
    cout = 2 * units
    rows = K * T

    vmem_limit = _vmem_limit_bytes()
    x_itemsize = jnp.dtype(x.dtype).itemsize
    out_itemsize = jnp.dtype(out_dtype).itemsize

    if voxels_per_tile is None:
        V, num_tiles = _choose_output_tiling(K, T, cout, x_itemsize,
                                             out_itemsize, vmem_limit)
    else:
        V = max(8, ((int(voxels_per_tile) + 7) // 8) * 8)
        num_tiles = max(2, pl.cdiv(K, V))

    K_pad = num_tiles * V
    g = _choose_stats_grouping(num_tiles, V, T, x_itemsize, vmem_limit)
    num_stats_tiles = num_tiles // g
    stats_rows = g * V * T

    # Zero-pad K up to K_pad (zero rows contribute 0 to the BN sums and get
    # sliced off the output).  No wrapper-side dtype cast of x (extra HBM pass);
    # feed bf16 from the producer if available to halve the x stream.
    x2 = x.reshape(rows, cin)
    mask2 = mask.astype(jnp.float32)
    if K_pad > K:
        x2 = jnp.pad(x2, ((0, (K_pad - K) * T), (0, 0)))
        mask2 = jnp.pad(mask2, ((0, K_pad - K), (0, 0)))
    wm = w.astype(x2.dtype)

    cparams = pltpu.CompilerParams(
        dimension_semantics=("parallel",),
        vmem_limit_bytes=vmem_limit,
    )

    # ---- Phase 1: partial sum / sum-of-squares per channel -----------------
    psums = pl.pallas_call(
        vfe_stats_kernel,
        out_shape=jax.ShapeDtypeStruct((num_stats_tiles, 2, units), jnp.float32),
        grid=(num_stats_tiles,),
        in_specs=[
            pl.BlockSpec((stats_rows, cin), lambda i: (i, 0)),
            pl.BlockSpec((cin, units), lambda i: (0, 0)),
        ],
        out_specs=pl.BlockSpec((1, 2, units), lambda i: (i, 0, 0)),
        compiler_params=cparams,
    )(x2, wm)

    # Fold BatchNorm (batch statistics, biased variance) + affine into one
    # per-channel scale/shift.  Divide by the TRUE row count (padding-safe).
    sums = jnp.sum(psums, axis=0)                        # (2, units)
    mean = sums[0] / rows
    var = jnp.maximum(sums[1] / rows - mean * mean, 0.0)
    scale = gamma * jax.lax.rsqrt(var + BN_EPS)
    shift = beta - mean * scale
    scale_shift = jnp.stack([scale, shift]).astype(jnp.float32)   # (2, units)

    # ---- Phase 2: normalize + ReLU + per-voxel max + mask + write ----------
    out = pl.pallas_call(
        vfe_out_kernel,
        out_shape=jax.ShapeDtypeStruct((K_pad, T, cout), out_dtype),
        grid=(num_tiles,),
        in_specs=[
            pl.BlockSpec((V * T, cin), lambda i: (i, 0)),
            pl.BlockSpec((cin, units), lambda i: (0, 0)),
            pl.BlockSpec((2, units), lambda i: (0, 0)),
            pl.BlockSpec((V, T), lambda i: (i, 0)),
        ],
        out_specs=pl.BlockSpec((V, T, cout), lambda i: (i, 0, 0)),
        compiler_params=cparams,
    )(x2, wm, scale_shift, mask2)

    if K_pad > K:
        out = out[:K]
    return out


# ----------------------------------------------------------------------------
# Reference & params
# ----------------------------------------------------------------------------
def vfe_reference(x, mask, w, gamma, beta):
    """Pure-JAX reference mirroring the PyTorch module (training-mode BN)."""
    K, T, cin = x.shape
    units = w.shape[1]
    xf = x.reshape(K * T, cin)
    y = jnp.dot(xf, w, preferred_element_type=jnp.float32)
    mean = jnp.mean(y, axis=0, keepdims=True)
    var = jnp.mean((y - mean) ** 2, axis=0, keepdims=True)
    y = (y - mean) * jax.lax.rsqrt(var + BN_EPS) * gamma + beta
    y = jnp.maximum(y, 0.0)
    pwf = y.reshape(K, T, units)
    laf = jnp.broadcast_to(jnp.max(pwf, axis=1, keepdims=True), (K, T, units))
    pwcf = jnp.concatenate([pwf, laf], axis=2)
    return pwcf * mask.astype(jnp.float32)[:, :, None]


def make_params(key, cin, cout):
    """Parameter init mirroring nn.Linear / nn.BatchNorm1d defaults."""
    assert cout % 2 == 0
    units = cout // 2
    bound = 1.0 / jnp.sqrt(cin)
    # torch Linear weight is (units, cin); we store its transpose (cin, units).
    w = jax.random.uniform(key, (cin, units), jnp.float32, -bound, bound)
    # The Linear bias is intentionally omitted: training-mode BatchNorm subtracts
    # the batch mean, which cancels any constant per-channel bias exactly.
    # TODO(synk): reinstate the bias if eval-mode (running-stats) BN is needed.
    gamma = jnp.ones((units,), jnp.float32)   # BatchNorm1d weight
    beta = jnp.zeros((units,), jnp.float32)   # BatchNorm1d bias
    return w, gamma, beta


if __name__ == "__main__":
    # Small shapes consistent with the module: K voxels, T points per voxel,
    # cin input point features, cout output channels (units = cout // 2).
    # K is deliberately not a multiple of 8 to exercise the padding path.
    K, T, cin, cout = 37, 8, 16, 128

    key = jax.random.PRNGKey(0)
    k_x, k_m, k_p = jax.random.split(key, 3)
    x = jax.random.normal(k_x, (K, T, cin), jnp.float32)
    mask = (jax.random.uniform(k_m, (K, T)) < 0.75).astype(jnp.float32)
    w, gamma, beta = make_params(k_p, cin, cout)

    # Forced small tiles -> multi-tile grid + K padding are exercised.
    out = vfe_forward(x, mask, w, gamma, beta, voxels_per_tile=8)
    out = jax.block_until_ready(out)
    assert out.shape == (K, T, cout)

    # Default, hardware/VMEM-sized tiling (>= 2 tiles for megacore).
    out2 = jax.block_until_ready(vfe_forward(x, mask, w, gamma, beta))
    assert out2.shape == (K, T, cout)

    ref = vfe_reference(x, mask, w, gamma, beta)
    assert jnp.allclose(out, ref, atol=1e-3, rtol=1e-3)
    assert jnp.allclose(out2, ref, atol=1e-3, rtol=1e-3)
    print("KERNEL_OK")
</pallas_src>

<mosaic_0001>
module attributes {stable_mosaic.version = 11 : i64} {
  func.func @vfe_stats_kernel(%arg0: i32, %arg1: memref<320x16xf32, #tpu.memory_space<vmem>>, %arg2: memref<16x64xf32, #tpu.memory_space<vmem>>, %arg3: memref<1x2x64xf32, #tpu.memory_space<vmem>>) attributes {dimension_semantics = [#tpu.dimension_semantics<parallel>], iteration_bounds = array<i64: 1>, scalar_prefetch = 0 : i64, scratch_operands = 0 : i64, tpu.core_type = #tpu.core_type<tc>, window_params = [{transform_indices = @transform_0, window_bounds = array<i64: 320, 16>}, {pipeline_mode = #tpu.pipeline_mode<synchronous>, transform_indices = @transform_1, window_bounds = array<i64: 16, 64>}, {transform_indices = @transform_2, window_bounds = array<i64: 1, 2, 64>}]} {
    %c0 = arith.constant 0 : index
    %c0_0 = arith.constant 0 : index
    %0 = vector.load %arg1[%c0, %c0_0] : memref<320x16xf32, #tpu.memory_space<vmem>>, vector<320x16xf32>
    %c0_1 = arith.constant 0 : index
    %c0_2 = arith.constant 0 : index
    %1 = vector.load %arg2[%c0_1, %c0_2] : memref<16x64xf32, #tpu.memory_space<vmem>>, vector<16x64xf32>
    %cst = arith.constant dense<0.000000e+00> : vector<320x64xf32>
    %2 = tpu.matmul %0, %1, %cst {dimension_numbers = #tpu.dot_dimension_numbers<[1], [0], [0], [1], [0, 0, 1, 1], [], []>} : vector<320x16xf32>, vector<16x64xf32>, vector<320x64xf32> -> vector<320x64xf32>
    %cst_3 = arith.constant dense<0.000000e+00> : vector<64xf32>
    %3 = vector.multi_reduction <add>, %2, %cst_3 [0] : vector<320x64xf32> to vector<64xf32>
    %4 = vector.shape_cast %3 : vector<64xf32> to vector<1x64xf32>
    %c0_4 = arith.constant 0 : index
    %c0_5 = arith.constant 0 : index
    %c0_6 = arith.constant 0 : index
    %5 = vector.load %arg3[%c0_4, %c0_5, %c0_6] : memref<1x2x64xf32, #tpu.memory_space<vmem>>, vector<1x1x64xf32>
    %6 = vector.shape_cast %5 : vector<1x1x64xf32> to vector<1x64xf32>
    %7 = vector.shape_cast %4 : vector<1x64xf32> to vector<1x1x64xf32>
    tpu.vector_store %arg3[%c0_4, %c0_5, %c0_6], %7 {strides = array<i32>} : memref<1x2x64xf32, #tpu.memory_space<vmem>>, vector<1x1x64xf32>,
    %8 = arith.mulf %2, %2 : vector<320x64xf32>
    %cst_7 = arith.constant dense<0.000000e+00> : vector<64xf32>
    %9 = vector.multi_reduction <add>, %8, %cst_7 [0] : vector<320x64xf32> to vector<64xf32>
    %10 = vector.shape_cast %9 : vector<64xf32> to vector<1x64xf32>
    %c0_8 = arith.constant 0 : index
    %c1 = arith.constant 1 : index
    %c0_9 = arith.constant 0 : index
    %11 = vector.load %arg3[%c0_8, %c1, %c0_9] : memref<1x2x64xf32, #tpu.memory_space<vmem>>, vector<1x1x64xf32>
    %12 = vector.shape_cast %11 : vector<1x1x64xf32> to vector<1x64xf32>
    %13 = vector.shape_cast %10 : vector<1x64xf32> to vector<1x1x64xf32>
    tpu.vector_store %arg3[%c0_8, %c1, %c0_9], %13 {strides = array<i32>} : memref<1x2x64xf32, #tpu.memory_space<vmem>>, vector<1x1x64xf32>,
    return
  }
  func.func @transform_0(%arg0: i32) -> (i32, i32) {
    %c0_i32 = arith.constant 0 : i32
    %c0_i32_0 = arith.constant 0 : i32
    return %arg0, %c0_i32 : i32, i32
  }
  func.func @transform_1(%arg0: i32) -> (i32, i32) {
    %c0_i32 = arith.constant 0 : i32
    %c0_i32_0 = arith.constant 0 : i32
    %c0_i32_1 = arith.constant 0 : i32
    return %c0_i32, %c0_i32_0 : i32, i32
  }
  func.func @transform_2(%arg0: i32) -> (i32, i32, i32) {
    %c0_i32 = arith.constant 0 : i32
    %c0_i32_0 = arith.constant 0 : i32
    %c0_i32_1 = arith.constant 0 : i32
    return %arg0, %c0_i32, %c0_i32_0 : i32, i32, i32
  }
}

</mosaic_0001>

<llo_original>
// kernel: tpu_custom_call.1
$region0: #{tpu_custom_call.1}
  #allocation0 [shape = 'u32[]', space=smem, size = 0x4, offset = 0x4, fixed_abs, tag = 'smem constant byte address 0x4 - core index']
  #allocation1 [shape = 'u32[144,128]{1,0:T(1,128)}', space=vmem, size = 0x12000, scoped, tag = 'internal scratch']
  %s0 = inlined_call_operand.vmem [shape: f32[320,16], index: 0, kind: input, shape index: {}]
  %s1 = inlined_call_operand.vmem [shape: f32[16,64], index: 1, kind: input, shape index: {}]
  %s2 = inlined_call_operand.hbm [shape: f32[1,2,64], index: 2, kind: output, shape index: {}]
  %s3 = sld [smem:[#allocation0]]
  $region18: #{tpu_custom_call.1} parent=0
    _
  %s5 = ssub.s32 1, %s3
  %s6 = scalar_select 0, %s5, %s3
  $region1: #{tpu_custom_call.1} parent=0
    #allocation2 [shape = 'u8[1024]{0}', space=vmem, size = 0x400, scoped, tag = 'output window, operand 0, single buffered']
    #allocation3 [shape = 's32[1]{0}', space=sflag, size = 0x4, scoped, tag = 'scoped memory for tpu_custom_call.1']
    %7 = vsyncpa [#allocation3], 0
    // Predicated region
    $region2: #{tpu_custom_call.1} parent=1 // pred_check
      _
    $region3: #{tpu_custom_call.1} parent=1 // pred_check_branch
      %9 = sbr.rel (0) target = $region5
    $region4: #{tpu_custom_call.1} parent=1 // pred_region
      _
    $region5: #{tpu_custom_call.1} parent=1 // pred_fallthru
      _
    // Predicated region
    $region6: #{tpu_custom_call.1} parent=1 // pred_check
      _
    $region7: #{tpu_custom_call.1} parent=1 // pred_check_branch
      %11 = sbr.rel (0) target = $region9
    $region8: #{tpu_custom_call.1} parent=1 // pred_region
      _
    $region9: #{tpu_custom_call.1} parent=1 // pred_fallthru
      _
    %v12 = vld [vmem:[%s0] sm:$0xff]
    %v13 = vld [vmem:[%s0 + $0x8] sm:$0xff]
    %v14 = vld [vmem:[%s0 + $0x10] sm:$0xff]
    %v15 = vld [vmem:[%s0 + $0x18] sm:$0xff]
    %v16 = vld [vmem:[%s0 + $0x20] sm:$0xff]
    %v17 = vld [vmem:[%s0 + $0x28] sm:$0xff]
    %v18 = vld [vmem:[%s0 + $0x30] sm:$0xff]
    %v19 = vld [vmem:[%s0 + $0x38] sm:$0xff]
    %v20 = vld [vmem:[%s0 + $0x40] sm:$0xff]
    %v21 = vld [vmem:[%s0 + $0x48] sm:$0xff]
    %v22 = vld [vmem:[%s0 + $0x50] sm:$0xff]
    %v23 = vld [vmem:[%s0 + $0x58] sm:$0xff]
    %v24 = vld [vmem:[%s0 + $0x60] sm:$0xff]
    %v25 = vld [vmem:[%s0 + $0x68] sm:$0xff]
    %v26 = vld [vmem:[%s0 + $0x70] sm:$0xff]
    %v27 = vld [vmem:[%s0 + $0x78] sm:$0xff]
    %v28 = vld [vmem:[%s0 + $0x80] sm:$0xff]
    %v29 = vld [vmem:[%s0 + $0x88] sm:$0xff]
    %v30 = vld [vmem:[%s0 + $0x90] sm:$0xff]
    %v31 = vld [vmem:[%s0 + $0x98] sm:$0xff]
    %v32 = vld [vmem:[%s0 + $0xa0] sm:$0xff]
    %v33 = vld [vmem:[%s0 + $0xa8] sm:$0xff]
    %v34 = vld [vmem:[%s0 + $0xb0] sm:$0xff]
    %v35 = vld [vmem:[%s0 + $0xb8] sm:$0xff]
    %v36 = vld [vmem:[%s0 + $0xc0] sm:$0xff]
    %v37 = vld [vmem:[%s0 + $0xc8] sm:$0xff]
    %v38 = vld [vmem:[%s0 + $0xd0] sm:$0xff]
    %v39 = vld [vmem:[%s0 + $0xd8] sm:$0xff]
    %v40 = vld [vmem:[%s0 + $0xe0] sm:$0xff]
    %v41 = vld [vmem:[%s0 + $0xe8] sm:$0xff]
    %v42 = vld [vmem:[%s0 + $0xf0] sm:$0xff]
    %v43 = vld [vmem:[%s0 + $0xf8] sm:$0xff]
    %v44 = vld [vmem:[%s0 + $0x100] sm:$0xff]
    %v45 = vld [vmem:[%s0 + $0x108] sm:$0xff]
    %v46 = vld [vmem:[%s0 + $0x110] sm:$0xff]
    %v47 = vld [vmem:[%s0 + $0x118] sm:$0xff]
    %v48 = vld [vmem:[%s0 + $0x120] sm:$0xff]
    %v49 = vld [vmem:[%s0 + $0x128] sm:$0xff]
    %v50 = vld [vmem:[%s0 + $0x130] sm:$0xff]
    %v51 = vld [vmem:[%s0 + $0x138] sm:$0xff]
    %v52 = vld [vmem:[%s1] sm:$0xff]
    %v53 = vld [vmem:[%s1 + $0x8] sm:$0xff]
    %vm54 = vcmask 130048
    %v56 = vsel %vm54, %v12, 0
    %v59 = vsel %vm54, %v13, 0
    %v62 = vsel %vm54, %v14, 0
    %v65 = vsel %vm54, %v15, 0
    %v68 = vsel %vm54, %v16, 0
    %v71 = vsel %vm54, %v17, 0
    %v74 = vsel %vm54, %v18, 0
    %v77 = vsel %vm54, %v19, 0
    %v80 = vsel %vm54, %v20, 0
    %v83 = vsel %vm54, %v21, 0
    %v86 = vsel %vm54, %v22, 0
    %v89 = vsel %vm54, %v23, 0
    %v92 = vsel %vm54, %v24, 0
    %v95 = vsel %vm54, %v25, 0
    %v98 = vsel %vm54, %v26, 0
    %v101 = vsel %vm54, %v27, 0
    %v104 = vsel %vm54, %v28, 0
    %v107 = vsel %vm54, %v29, 0
    %v110 = vsel %vm54, %v30, 0
    %v113 = vsel %vm54, %v31, 0
    %v116 = vsel %vm54, %v32, 0
    %v119 = vsel %vm54, %v33, 0
    %v122 = vsel %vm54, %v34, 0
    %v125 = vsel %vm54, %v35, 0
    %v128 = vsel %vm54, %v36, 0
    %v131 = vsel %vm54, %v37, 0
    %v134 = vsel %vm54, %v38, 0
    %v137 = vsel %vm54, %v39, 0
    %v140 = vsel %vm54, %v40, 0
    %v143 = vsel %vm54, %v41, 0
    %v146 = vsel %vm54, %v42, 0
    %v149 = vsel %vm54, %v43, 0
    %v152 = vsel %vm54, %v44, 0
    %v155 = vsel %vm54, %v45, 0
    %v158 = vsel %vm54, %v46, 0
    %v161 = vsel %vm54, %v47, 0
    %v164 = vsel %vm54, %v48, 0
    %v167 = vsel %vm54, %v49, 0
    %v170 = vsel %vm54, %v50, 0
    %v173 = vsel %vm54, %v51, 0
    %175 = vmatprep.subr.mxu0 0.0
    %176 = vmatpush1.msra.mxu0 0.0
    %177 = vmatprep.subr.mxu0 0.0
    %178 = vmatpush1.msra.mxu0 0.0
    %179 = vmatprep.subr.mxu0 0.0
    %180 = vmatpush1.msra.mxu0 0.0
    %181 = vmatprep.subr.mxu0 0.0
    %182 = vmatpush1.msra.mxu0 0.0
    %183 = vmatprep.subr.mxu0 0.0
    %184 = vmatpush1.msra.mxu0 0.0
    %185 = vmatprep.subr.mxu0 0.0
    %186 = vmatpush1.msra.mxu0 0.0
    %187 = vmatprep.subr.mxu0 0.0
    %188 = vmatpush1.msra.mxu0 0.0
    %189 = vmatprep.subr.mxu0 0.0
    %190 = vmatpush1.msra.mxu0 0.0
    %191 = vmatprep.subr.mxu0 0.0
    %192 = vmatpush1.msra.mxu0 0.0
    %193 = vmatprep.subr.mxu0 0.0
    %194 = vmatpush1.msra.mxu0 0.0
    %195 = vmatprep.subr.mxu0 0.0
    %196 = vmatpush1.msra.mxu0 0.0
    %197 = vmatprep.subr.mxu0 0.0
    %198 = vmatpush1.msra.mxu0 0.0
    %199 = vmatprep.subr.mxu0 0.0
    %200 = vmatpush1.msra.mxu0 0.0
    %201 = vmatprep.subr.mxu0 0.0
    %202 = vmatpush1.msra.mxu0 0.0
    %203 = vmatprep.subr.mxu0 0.0
    %204 = vmatpush1.msra.mxu0 %v53
    %205 = vmatprep.subr.mxu0 0.0
    %206 = vmatpush1.msra.mxu0 %v52
    %207 = vmatprep.subr.mxu0 0.0
    %208 = vmatpush2.msra.mxu0 0.0
    %209 = vmatprep.subr.mxu0 0.0
    %210 = vmatpush2.msra.mxu0 0.0
    %211 = vmatprep.subr.mxu0 0.0
    %212 = vmatpush2.msra.mxu0 0.0
    %213 = vmatprep.subr.mxu0 0.0
    %214 = vmatpush2.msra.mxu0 0.0
    %215 = vmatprep.subr.mxu0 0.0
    %216 = vmatpush2.msra.mxu0 0.0
    %217 = vmatprep.subr.mxu0 0.0
    %218 = vmatpush2.msra.mxu0 0.0
    %219 = vmatprep.subr.mxu0 0.0
    %220 = vmatpush2.msra.mxu0 0.0
    %221 = vmatprep.subr.mxu0 0.0
    %222 = vmatpush2.msra.mxu0 0.0
    %223 = vmatprep.subr.mxu0 0.0
    %224 = vmatpush2.msra.mxu0 0.0
    %225 = vmatprep.subr.mxu0 0.0
    %226 = vmatpush2.msra.mxu0 0.0
    %227 = vmatprep.subr.mxu0 0.0
    %228 = vmatpush2.msra.mxu0 0.0
    %229 = vmatprep.subr.mxu0 0.0
    %230 = vmatpush2.msra.mxu0 0.0
    %231 = vmatprep.subr.mxu0 0.0
    %232 = vmatpush2.msra.mxu0 0.0
    %233 = vmatprep.subr.mxu0 0.0
    %234 = vmatpush2.msra.mxu0 0.0
    %235 = vmatprep.subr.mxu0 0.0
    %236 = vmatpush2.msra.mxu0 0.0
    %237 = vmatprep.subr.mxu0 0.0
    %238 = vmatpush2.msra.mxu0 0.0
    %239 = vmatprep.mubr.f32.mxu0 0.0
    %240 = vmatmul.mubr.f32.gmra.mxu0 %v56
    %v241 = vpop.f32.mrf.mxu0
    %v242 = vadd.f32 0.0, %v241
    %v243 = vpop.f32.mrf.mxu0
    %244 = vmatprep.mubr.f32.mxu0 0.0
    %245 = vmatmul.mubr.f32.gmra.mxu0 %v59
    %v246 = vpop.f32.mrf.mxu0
    %v247 = vadd.f32 0.0, %v246
    %v248 = vpop.f32.mrf.mxu0
    %249 = vmatprep.mubr.f32.mxu0 0.0
    %250 = vmatmul.mubr.f32.gmra.mxu0 %v62
    %v251 = vpop.f32.mrf.mxu0
    %v252 = vadd.f32 0.0, %v251
    %v253 = vpop.f32.mrf.mxu0
    %254 = vmatprep.mubr.f32.mxu0 0.0
    %255 = vmatmul.mubr.f32.gmra.mxu0 %v65
    %v256 = vpop.f32.mrf.mxu0
    %v257 = vadd.f32 0.0, %v256
    %v258 = vpop.f32.mrf.mxu0
    %259 = vmatprep.mubr.f32.mxu0 0.0
    %260 = vmatmul.mubr.f32.gmra.mxu0 %v68
    %v261 = vpop.f32.mrf.mxu0
    %v262 = vadd.f32 0.0, %v261
    %v263 = vpop.f32.mrf.mxu0
    %264 = vmatprep.mubr.f32.mxu0 0.0
    %265 = vmatmul.mubr.f32.gmra.mxu0 %v71
    %v266 = vpop.f32.mrf.mxu0
    %v267 = vadd.f32 0.0, %v266
    %v268 = vpop.f32.mrf.mxu0
    %269 = vmatprep.mubr.f32.mxu0 0.0
    %270 = vmatmul.mubr.f32.gmra.mxu0 %v74
    %v271 = vpop.f32.mrf.mxu0
    %v272 = vadd.f32 0.0, %v271
    %v273 = vpop.f32.mrf.mxu0
    %274 = vmatprep.mubr.f32.mxu0 0.0
    %275 = vmatmul.mubr.f32.gmra.mxu0 %v77
    %v276 = vpop.f32.mrf.mxu0
    %v277 = vadd.f32 0.0, %v276
    %v278 = vpop.f32.mrf.mxu0
    %279 = vmatprep.mubr.f32.mxu0 0.0
    %280 = vmatmul.mubr.f32.gmra.mxu0 %v80
    %v281 = vpop.f32.mrf.mxu0
    %v282 = vadd.f32 0.0, %v281
    %v283 = vpop.f32.mrf.mxu0
    %284 = vmatprep.mubr.f32.mxu0 0.0
    %285 = vmatmul.mubr.f32.gmra.mxu0 %v83
    %v286 = vpop.f32.mrf.mxu0
    %v287 = vadd.f32 0.0, %v286
    %v288 = vpop.f32.mrf.mxu0
    %289 = vmatprep.mubr.f32.mxu0 0.0
    %290 = vmatmul.mubr.f32.gmra.mxu0 %v86
    %v291 = vpop.f32.mrf.mxu0
    %v292 = vadd.f32 0.0, %v291
    %v293 = vpop.f32.mrf.mxu0
    %294 = vmatprep.mubr.f32.mxu0 0.0
    %295 = vmatmul.mubr.f32.gmra.mxu0 %v89
    %v296 = vpop.f32.mrf.mxu0
    %v297 = vadd.f32 0.0, %v296
    %v298 = vpop.f32.mrf.mxu0
    %299 = vmatprep.mubr.f32.mxu0 0.0
    %300 = vmatmul.mubr.f32.gmra.mxu0 %v92
    %v301 = vpop.f32.mrf.mxu0
    %v302 = vadd.f32 0.0, %v301
    %v303 = vpop.f32.mrf.mxu0
    %304 = vmatprep.mubr.f32.mxu0 0.0
    %305 = vmatmul.mubr.f32.gmra.mxu0 %v95
    %v306 = vpop.f32.mrf.mxu0
    %v307 = vadd.f32 0.0, %v306
    %v308 = vpop.f32.mrf.mxu0
    %309 = vmatprep.mubr.f32.mxu0 0.0
    %310 = vmatmul.mubr.f32.gmra.mxu0 %v98
    %v311 = vpop.f32.mrf.mxu0
    %v312 = vadd.f32 0.0, %v311
    %v313 = vpop.f32.mrf.mxu0
    %314 = vmatprep.mubr.f32.mxu0 0.0
    %315 = vmatmul.mubr.f32.gmra.mxu0 %v101
    %v316 = vpop.f32.mrf.mxu0
    %v317 = vadd.f32 0.0, %v316
    %v318 = vpop.f32.mrf.mxu0
    %319 = vmatprep.mubr.f32.mxu0 0.0
    %320 = vmatmul.mubr.f32.gmra.mxu0 %v104
    %v321 = vpop.f32.mrf.mxu0
    %v322 = vadd.f32 0.0, %v321
    %v323 = vpop.f32.mrf.mxu0
    %324 = vmatprep.mubr.f32.mxu0 0.0
    %325 = vmatmul.mubr.f32.gmra.mxu0 %v107
    %v326 = vpop.f32.mrf.mxu0
    %v327 = vadd.f32 0.0, %v326
    %v328 = vpop.f32.mrf.mxu0
    %329 = vmatprep.mubr.f32.mxu0 0.0
    %330 = vmatmul.mubr.f32.gmra.mxu0 %v110
    %v331 = vpop.f32.mrf.mxu0
    %v332 = vadd.f32 0.0, %v331
    %v333 = vpop.f32.mrf.mxu0
    %334 = vmatprep.mubr.f32.mxu0 0.0
    %335 = vmatmul.mubr.f32.gmra.mxu0 %v113
    %v336 = vpop.f32.mrf.mxu0
    %v337 = vadd.f32 0.0, %v336
    %v338 = vpop.f32.mrf.mxu0
    %339 = vmatprep.mubr.f32.mxu0 0.0
    %340 = vmatmul.mubr.f32.gmra.mxu0 %v116
    %v341 = vpop.f32.mrf.mxu0
    %v342 = vadd.f32 0.0, %v341
    %v343 = vpop.f32.mrf.mxu0
    %344 = vmatprep.mubr.f32.mxu0 0.0
    %345 = vmatmul.mubr.f32.gmra.mxu0 %v119
    %v346 = vpop.f32.mrf.mxu0
    %v347 = vadd.f32 0.0, %v346
    %v348 = vpop.f32.mrf.mxu0
    %349 = vmatprep.mubr.f32.mxu0 0.0
    %350 = vmatmul.mubr.f32.gmra.mxu0 %v122
    %v351 = vpop.f32.mrf.mxu0
    %v352 = vadd.f32 0.0, %v351
    %v353 = vpop.f32.mrf.mxu0
    %354 = vmatprep.mubr.f32.mxu0 0.0
    %355 = vmatmul.mubr.f32.gmra.mxu0 %v125
    %v356 = vpop.f32.mrf.mxu0
    %v357 = vadd.f32 0.0, %v356
    %v358 = vpop.f32.mrf.mxu0
    %359 = vmatprep.mubr.f32.mxu0 0.0
    %360 = vmatmul.mubr.f32.gmra.mxu0 %v128
    %v361 = vpop.f32.mrf.mxu0
    %v362 = vadd.f32 0.0, %v361
    %v363 = vpop.f32.mrf.mxu0
    %364 = vmatprep.mubr.f32.mxu0 0.0
    %365 = vmatmul.mubr.f32.gmra.mxu0 %v131
    %v366 = vpop.f32.mrf.mxu0
    %v367 = vadd.f32 0.0, %v366
    %v368 = vpop.f32.mrf.mxu0
    %369 = vmatprep.mubr.f32.mxu0 0.0
    %370 = vmatmul.mubr.f32.gmra.mxu0 %v134
    %v371 = vpop.f32.mrf.mxu0
    %v372 = vadd.f32 0.0, %v371
    %v373 = vpop.f32.mrf.mxu0
    %374 = vmatprep.mubr.f32.mxu0 0.0
    %375 = vmatmul.mubr.f32.gmra.mxu0 %v137
    %v376 = vpop.f32.mrf.mxu0
    %v377 = vadd.f32 0.0, %v376
    %v378 = vpop.f32.mrf.mxu0
    %379 = vmatprep.mubr.f32.mxu0 0.0
    %380 = vmatmul.mubr.f32.gmra.mxu0 %v140
    %v381 = vpop.f32.mrf.mxu0
    %v382 = vadd.f32 0.0, %v381
    %v383 = vpop.f32.mrf.mxu0
    %384 = vmatprep.mubr.f32.mxu0 0.0
    %385 = vmatmul.mubr.f32.gmra.mxu0 %v143
    %v386 = vpop.f32.mrf.mxu0
    %v387 = vadd.f32 0.0, %v386
    %v388 = vpop.f32.mrf.mxu0
    %389 = vmatprep.mubr.f32.mxu0 0.0
    %390 = vmatmul.mubr.f32.gmra.mxu0 %v146
    %v391 = vpop.f32.mrf.mxu0
    %v392 = vadd.f32 0.0, %v391
    %v393 = vpop.f32.mrf.mxu0
    %394 = vmatprep.mubr.f32.mxu0 0.0
    %395 = vmatmul.mubr.f32.gmra.mxu0 %v149
    %v396 = vpop.f32.mrf.mxu0
    %v397 = vadd.f32 0.0, %v396
    %v398 = vpop.f32.mrf.mxu0
    %399 = vmatprep.mubr.f32.mxu0 0.0
    %400 = vmatmul.mubr.f32.gmra.mxu0 %v152
    %v401 = vpop.f32.mrf.mxu0
    %v402 = vadd.f32 0.0, %v401
    %v403 = vpop.f32.mrf.mxu0
    %404 = vmatprep.mubr.f32.mxu0 0.0
    %405 = vmatmul.mubr.f32.gmra.mxu0 %v155
    %v406 = vpop.f32.mrf.mxu0
    %v407 = vadd.f32 0.0, %v406
    %v408 = vpop.f32.mrf.mxu0
    %409 = vmatprep.mubr.f32.mxu0 0.0
    %410 = vmatmul.mubr.f32.gmra.mxu0 %v158
    %v411 = vpop.f32.mrf.mxu0
    %v412 = vadd.f32 0.0, %v411
    %v413 = vpop.f32.mrf.mxu0
    %414 = vmatprep.mubr.f32.mxu0 0.0
    %415 = vmatmul.mubr.f32.gmra.mxu0 %v161
    %v416 = vpop.f32.mrf.mxu0
    %v417 = vadd.f32 0.0, %v416
    %v418 = vpop.f32.mrf.mxu0
    %419 = vmatprep.mubr.f32.mxu0 0.0
    %420 = vmatmul.mubr.f32.gmra.mxu0 %v164
    %v421 = vpop.f32.mrf.mxu0
    %v422 = vadd.f32 0.0, %v421
    %v423 = vpop.f32.mrf.mxu0
    %424 = vmatprep.mubr.f32.mxu0 0.0
    %425 = vmatmul.mubr.f32.gmra.mxu0 %v167
    %v426 = vpop.f32.mrf.mxu0
    %v427 = vadd.f32 0.0, %v426
    %v428 = vpop.f32.mrf.mxu0
    %429 = vmatprep.mubr.f32.mxu0 0.0
    %430 = vmatmul.mubr.f32.gmra.mxu0 %v170
    %v431 = vpop.f32.mrf.mxu0
    %v432 = vadd.f32 0.0, %v431
    %v433 = vpop.f32.mrf.mxu0
    %434 = vmatprep.mubr.f32.mxu0 0.0
    %435 = vmatmul.mubr.f32.gmra.mxu0 %v173
    %v436 = vpop.f32.mrf.mxu0
    %v437 = vadd.f32 0.0, %v436
    %v438 = vpop.f32.mrf.mxu0
    %439 = vdwg.mxu0
    %vm440 = vcmask 523264
    %v441 = vsel %vm440, %v242, 0.0
    %v442 = vsel %vm440, %v247, 0.0
    %v443 = vadd.f32 %v441, %v442
    %v444 = vsel %vm440, %v252, 0.0
    %v445 = vadd.f32 %v443, %v444
    %v446 = vsel %vm440, %v257, 0.0
    %v447 = vadd.f32 %v445, %v446
    %v448 = vsel %vm440, %v262, 0.0
    %v449 = vadd.f32 %v447, %v448
    %v450 = vsel %vm440, %v267, 0.0
    %v451 = vadd.f32 %v449, %v450
    %v452 = vsel %vm440, %v272, 0.0
    %v453 = vadd.f32 %v451, %v452
    %v454 = vsel %vm440, %v277, 0.0
    %v455 = vadd.f32 %v453, %v454
    %v456 = vsel %vm440, %v282, 0.0
    %v457 = vadd.f32 %v455, %v456
    %v458 = vsel %vm440, %v287, 0.0
    %v459 = vadd.f32 %v457, %v458
    %v460 = vsel %vm440, %v292, 0.0
    %v461 = vadd.f32 %v459, %v460
    %v462 = vsel %vm440, %v297, 0.0
    %v463 = vadd.f32 %v461, %v462
    %v464 = vsel %vm440, %v302, 0.0
    %v465 = vadd.f32 %v463, %v464
    %v466 = vsel %vm440, %v307, 0.0
    %v467 = vadd.f32 %v465, %v466
    %v468 = vsel %vm440, %v312, 0.0
    %v469 = vadd.f32 %v467, %v468
    %v470 = vsel %vm440, %v317, 0.0
    %v471 = vadd.f32 %v469, %v470
    %v472 = vsel %vm440, %v322, 0.0
    %v473 = vadd.f32 %v471, %v472
    %v474 = vsel %vm440, %v327, 0.0
    %v475 = vadd.f32 %v473, %v474
    %v476 = vsel %vm440, %v332, 0.0
    %v477 = vadd.f32 %v475, %v476
    %v478 = vsel %vm440, %v337, 0.0
    %v479 = vadd.f32 %v477, %v478
    %v480 = vsel %vm440, %v342, 0.0
    %v481 = vadd.f32 %v479, %v480
    %v482 = vsel %vm440, %v347, 0.0
    %v483 = vadd.f32 %v481, %v482
    %v484 = vsel %vm440, %v352, 0.0
    %v485 = vadd.f32 %v483, %v484
    %v486 = vsel %vm440, %v357, 0.0
    %v487 = vadd.f32 %v485, %v486
    %v488 = vsel %vm440, %v362, 0.0
    %v489 = vadd.f32 %v487, %v488
    %v490 = vsel %vm440, %v367, 0.0
    %v491 = vadd.f32 %v489, %v490
    %v492 = vsel %vm440, %v372, 0.0
    %v493 = vadd.f32 %v491, %v492
    %v494 = vsel %vm440, %v377, 0.0
    %v495 = vadd.f32 %v493, %v494
    %v496 = vsel %vm440, %v382, 0.0
    %v497 = vadd.f32 %v495, %v496
    %v498 = vsel %vm440, %v387, 0.0
    %v499 = vadd.f32 %v497, %v498
    %v500 = vsel %vm440, %v392, 0.0
    %v501 = vadd.f32 %v499, %v500
    %v502 = vsel %vm440, %v397, 0.0
    %v503 = vadd.f32 %v501, %v502
    %v504 = vsel %vm440, %v402, 0.0
    %v505 = vadd.f32 %v503, %v504
    %v506 = vsel %vm440, %v407, 0.0
    %v507 = vadd.f32 %v505, %v506
    %v508 = vsel %vm440, %v412, 0.0
    %v509 = vadd.f32 %v507, %v508
    %v510 = vsel %vm440, %v417, 0.0
    %v511 = vadd.f32 %v509, %v510
    %v512 = vsel %vm440, %v422, 0.0
    %v513 = vadd.f32 %v511, %v512
    %v514 = vsel %vm440, %v427, 0.0
    %v515 = vadd.f32 %v513, %v514
    %v516 = vsel %vm440, %v432, 0.0
    %v517 = vadd.f32 %v515, %v516
    %v518 = vsel %vm440, %v437, 0.0
    %v519 = vadd.f32 %v517, %v518
    %v520 = vrot.slane %v519, 4
    %v521 = vadd.f32 %v519, %v520
    %v522 = vrot.slane %v521, 2
    %v523 = vadd.f32 %v521, %v522
    %v524 = vrot.slane %v523, 1
    %v525 = vadd.f32 %v523, %v524
    %vm526 = vcmask 516096
    %527 = vst.msk [vmem:[#allocation2] sm:$0x1] %vm526, %v525
    %v528 = vmul.f32 %v242, %v242
    %v529 = vmul.f32 %v247, %v247
    %v530 = vmul.f32 %v252, %v252
    %v531 = vmul.f32 %v257, %v257
    %v532 = vmul.f32 %v262, %v262
    %v533 = vmul.f32 %v267, %v267
    %v534 = vmul.f32 %v272, %v272
    %v535 = vmul.f32 %v277, %v277
    %v536 = vmul.f32 %v282, %v282
    %v537 = vmul.f32 %v287, %v287
    %v538 = vmul.f32 %v292, %v292
    %v539 = vmul.f32 %v297, %v297
    %v540 = vmul.f32 %v302, %v302
    %v541 = vmul.f32 %v307, %v307
    %v542 = vmul.f32 %v312, %v312
    %v543 = vmul.f32 %v317, %v317
    %v544 = vmul.f32 %v322, %v322
    %v545 = vmul.f32 %v327, %v327
    %v546 = vmul.f32 %v332, %v332
    %v547 = vmul.f32 %v337, %v337
    %v548 = vmul.f32 %v342, %v342
    %v549 = vmul.f32 %v347, %v347
    %v550 = vmul.f32 %v352, %v352
    %v551 = vmul.f32 %v357, %v357
    %v552 = vmul.f32 %v362, %v362
    %v553 = vmul.f32 %v367, %v367
    %v554 = vmul.f32 %v372, %v372
    %v555 = vmul.f32 %v377, %v377
    %v556 = vmul.f32 %v382, %v382
    %v557 = vmul.f32 %v387, %v387
    %v558 = vmul.f32 %v392, %v392
    %v559 = vmul.f32 %v397, %v397
    %v560 = vmul.f32 %v402, %v402
    %v561 = vmul.f32 %v407, %v407
    %v562 = vmul.f32 %v412, %v412
    %v563 = vmul.f32 %v417, %v417
    %v564 = vmul.f32 %v422, %v422
    %v565 = vmul.f32 %v427, %v427
    %v566 = vmul.f32 %v432, %v432
    %v567 = vmul.f32 %v437, %v437
    %v568 = vsel %vm440, %v528, 0.0
    %v569 = vsel %vm440, %v529, 0.0
    %v570 = vadd.f32 %v568, %v569
    %v571 = vsel %vm440, %v530, 0.0
    %v572 = vadd.f32 %v570, %v571
    %v573 = vsel %vm440, %v531, 0.0
    %v574 = vadd.f32 %v572, %v573
    %v575 = vsel %vm440, %v532, 0.0
    %v576 = vadd.f32 %v574, %v575
    %v577 = vsel %vm440, %v533, 0.0
    %v578 = vadd.f32 %v576, %v577
    %v579 = vsel %vm440, %v534, 0.0
    %v580 = vadd.f32 %v578, %v579
    %v581 = vsel %vm440, %v535, 0.0
    %v582 = vadd.f32 %v580, %v581
    %v583 = vsel %vm440, %v536, 0.0
    %v584 = vadd.f32 %v582, %v583
    %v585 = vsel %vm440, %v537, 0.0
    %v586 = vadd.f32 %v584, %v585
    %v587 = vsel %vm440, %v538, 0.0
    %v588 = vadd.f32 %v586, %v587
    %v589 = vsel %vm440, %v539, 0.0
    %v590 = vadd.f32 %v588, %v589
    %v591 = vsel %vm440, %v540, 0.0
    %v592 = vadd.f32 %v590, %v591
    %v593 = vsel %vm440, %v541, 0.0
    %v594 = vadd.f32 %v592, %v593
    %v595 = vsel %vm440, %v542, 0.0
    %v596 = vadd.f32 %v594, %v595
    %v597 = vsel %vm440, %v543, 0.0
    %v598 = vadd.f32 %v596, %v597
    %v599 = vsel %vm440, %v544, 0.0
    %v600 = vadd.f32 %v598, %v599
    %v601 = vsel %vm440, %v545, 0.0
    %v602 = vadd.f32 %v600, %v601
    %v603 = vsel %vm440, %v546, 0.0
    %v604 = vadd.f32 %v602, %v603
    %v605 = vsel %vm440, %v547, 0.0
    %v606 = vadd.f32 %v604, %v605
    %v607 = vsel %vm440, %v548, 0.0
    %v608 = vadd.f32 %v606, %v607
    %v609 = vsel %vm440, %v549, 0.0
    %v610 = vadd.f32 %v608, %v609
    %v611 = vsel %vm440, %v550, 0.0
    %v612 = vadd.f32 %v610, %v611
    %v613 = vsel %vm440, %v551, 0.0
    %v614 = vadd.f32 %v612, %v613
    %v615 = vsel %vm440, %v552, 0.0
    %v616 = vadd.f32 %v614, %v615
    %v617 = vsel %vm440, %v553, 0.0
    %v618 = vadd.f32 %v616, %v617
    %v619 = vsel %vm440, %v554, 0.0
    %v620 = vadd.f32 %v618, %v619
    %v621 = vsel %vm440, %v555, 0.0
    %v622 = vadd.f32 %v620, %v621
    %v623 = vsel %vm440, %v556, 0.0
    %v624 = vadd.f32 %v622, %v623
    %v625 = vsel %vm440, %v557, 0.0
    %v626 = vadd.f32 %v624, %v625
    %v627 = vsel %vm440, %v558, 0.0
    %v628 = vadd.f32 %v626, %v627
    %v629 = vsel %vm440, %v559, 0.0
    %v630 = vadd.f32 %v628, %v629
    %v631 = vsel %vm440, %v560, 0.0
    %v632 = vadd.f32 %v630, %v631
    %v633 = vsel %vm440, %v561, 0.0
    %v634 = vadd.f32 %v632, %v633
    %v635 = vsel %vm440, %v562, 0.0
    %v636 = vadd.f32 %v634, %v635
    %v637 = vsel %vm440, %v563, 0.0
    %v638 = vadd.f32 %v636, %v637
    %v639 = vsel %vm440, %v564, 0.0
    %v640 = vadd.f32 %v638, %v639
    %v641 = vsel %vm440, %v565, 0.0
    %v642 = vadd.f32 %v640, %v641
    %v643 = vsel %vm440, %v566, 0.0
    %v644 = vadd.f32 %v642, %v643
    %v645 = vsel %vm440, %v567, 0.0
    %v646 = vadd.f32 %v644, %v645
    %v647 = vrot.slane %v646, 4
    %v648 = vadd.f32 %v646, %v647
    %v649 = vrot.slane %v648, 2
    %v650 = vadd.f32 %v648, %v649
    %v651 = vrot.slane %v650, 1
    %v652 = vadd.f32 %v650, %v651
    %653 = vst.msk [vmem:[#allocation2 + $0x1] sm:$0x1] %vm526, %v652
    // Predicated region
    $region10: #{tpu_custom_call.1} parent=1 // pred_check
      _
    $region11: #{tpu_custom_call.1} parent=1 // pred_check_branch
      %655 = sbr.rel (0) target = $region13
    $region12: #{tpu_custom_call.1} parent=1 // pred_region
      %s657 = ssub.s32 32, 32
      %658 = vsyncadd [#allocation3], %s657
      %s660 = sshll.u32 [#allocation2], 4
      %s661 = int_to_ptr.vmem [resolvable:$true] %s660
      %663 = dma.vmem_to_hbm [thread:$0]  %s661, 32, %s2, [#allocation3]
    $region13: #{tpu_custom_call.1} parent=1 // pred_fallthru
      _
    // Predicated region
    $region14: #{tpu_custom_call.1} parent=1 // pred_check
      _
    $region15: #{tpu_custom_call.1} parent=1 // pred_check_branch
      %665 = sbr.rel (0) target = $region17
    $region16: #{tpu_custom_call.1} parent=1 // pred_region
      %666 = dma.done [#allocation3], 32
    $region17: #{tpu_custom_call.1} parent=1 // pred_fallthru
      _
    %667 = vsyncpa [#allocation3], 1

</llo_original>
